<compile_context>
chip_gen: v6e
topology: v6e:2x2x1
jax: 0.10.0
libtpu: 0.0.40
codegen_flags: <defaults>
</compile_context>

<pallas_src>
import jax
import jax.numpy as jnp
from jax.experimental import pallas as pl
from jax.experimental.pallas import tpu as pltpu


def _sdf_partial_kernel(pred_ref, targ_ref, out_ref):
    rt, L = pred_ref.shape  # static (row_tile, lane_width)

    p = pred_ref[...].astype(jnp.float32)
    t = targ_ref[...].astype(jnp.float32)
    abs_err = jnp.abs(jnp.tanh(p) - t)                        # (rt, L)

    # Sublane-group reduce: reshape (rt, L) -> (rt//8, 8, L) is layout
    # preserving (splits the row axis at vreg granularity); summing axis 0 is
    # pure vreg-wise VPU adds.
    part = jnp.sum(abs_err.reshape(rt // 8, 8, L), axis=0)    # (8, L)

    # Lane-group reduce: static, 128-aligned slices select whole vregs;
    # adds are VPU.  Result is one (8,128) vreg of partial sums.
    acc = part[:, 0:128]
    for j in range(1, L // 128):
        acc = acc + part[:, j * 128:(j + 1) * 128]

    out_ref[0] = acc                                          # (8, 128)


def sdf_loss(pred, targ, *, lane_width=512, max_row_tile=1024):
    """pred: (B, 1, H, W), targ: (B, H, W).  Returns {'loss': scalar}."""
    B, C, H, W = pred.shape
    assert C == 1, "SDFLoss squeezes channel dim 1 (expects C == 1)"
    assert targ.shape == (B, H, W)
    assert lane_width % 128 == 0 and max_row_tile % 8 == 0

    n = B * H * W
    L = lane_width

    # Rows needed at lane width L, row tile (multiple of 8, capped), padding.
    m = -(-n // L)
    row_tile = min(max_row_tile, ((m + 7) // 8) * 8)
    num_blocks = -(-m // row_tile)
    m_pad = num_blocks * row_tile
    pad = m_pad * L - n

    p_flat = pred.reshape(-1)
    t_flat = targ.reshape(-1)
    if pad:
        # Zero padding is exact for this loss: |tanh(0) - 0| = 0.
        p_flat = jnp.pad(p_flat, (0, pad))
        t_flat = jnp.pad(t_flat, (0, pad))
    pred2d = p_flat.reshape(m_pad, L)
    targ2d = t_flat.reshape(m_pad, L)

    n_pad = m_pad * L
    cost = pl.CostEstimate(
        flops=3 * n_pad,
        transcendentals=n_pad,
        bytes_accessed=8 * n_pad + num_blocks * 8 * 128 * 4,
    )

    partials = pl.pallas_call(
        _sdf_partial_kernel,
        out_shape=jax.ShapeDtypeStruct((num_blocks, 8, 128), jnp.float32),
        grid_spec=pltpu.PrefetchScalarGridSpec(
            num_scalar_prefetch=0,
            grid=(num_blocks,),
            in_specs=[
                pl.BlockSpec((row_tile, L), lambda i: (i, 0)),
                pl.BlockSpec((row_tile, L), lambda i: (i, 0)),
            ],
            out_specs=pl.BlockSpec((1, 8, 128), lambda i: (i, 0, 0)),
        ),
        compiler_params=pltpu.CompilerParams(
            dimension_semantics=("parallel",),   # dual-TC sharding on v7x
            vmem_limit_bytes=32 * 1024 * 1024,
        ),
        cost_estimate=cost,
    )(pred2d, targ2d)

    # Tiny final reduce + mean in the wrapper (divide by the real, unpadded N).
    loss = jnp.sum(partials) / jnp.float32(n)
    return {"loss": loss}


def sdf_loss_ref(pred, targ):
    """Pure-JAX reference for correctness check."""
    p = jnp.tanh(pred.astype(jnp.float32)).squeeze(1)
    return {"loss": jnp.mean(jnp.abs(p - targ.astype(jnp.float32)))}


if __name__ == "__main__":
    key = jax.random.PRNGKey(0)
    k1, k2 = jax.random.split(key)

    B, H, W = 2, 16, 16
    pred = jax.random.normal(k1, (B, 1, H, W), dtype=jnp.float32)
    targ = jax.random.normal(k2, (B, H, W), dtype=jnp.float32)

    out = sdf_loss(pred, targ)
    loss = jax.block_until_ready(out["loss"])

    ref = sdf_loss_ref(pred, targ)["loss"]
    assert jnp.allclose(loss, ref, atol=1e-5, rtol=1e-5), (loss, ref)

    print("KERNEL_OK")
</pallas_src>

<mosaic_0001>
module attributes {stable_mosaic.version = 11 : i64} {
  func.func @_sdf_partial_kernel(%arg0: i32, %arg1: memref<8x512xf32, #tpu.memory_space<vmem>>, %arg2: memref<8x512xf32, #tpu.memory_space<vmem>>, %arg3: memref<1x8x128xf32, #tpu.memory_space<vmem>>) attributes {dimension_semantics = [#tpu.dimension_semantics<parallel>], iteration_bounds = array<i64: 1>, scalar_prefetch = 0 : i64, scratch_operands = 0 : i64, tpu.core_type = #tpu.core_type<tc>, window_params = [{transform_indices = @transform_0, window_bounds = array<i64: 8, 512>}, {transform_indices = @transform_1, window_bounds = array<i64: 8, 512>}, {transform_indices = @transform_2, window_bounds = array<i64: 1, 8, 128>}]} {
    %c0 = arith.constant 0 : index
    %c0_0 = arith.constant 0 : index
    %0 = vector.load %arg1[%c0, %c0_0] : memref<8x512xf32, #tpu.memory_space<vmem>>, vector<8x512xf32>
    %c0_1 = arith.constant 0 : index
    %c0_2 = arith.constant 0 : index
    %1 = vector.load %arg2[%c0_1, %c0_2] : memref<8x512xf32, #tpu.memory_space<vmem>>, vector<8x512xf32>
    %2 = math.tanh %0 : vector<8x512xf32>
    %3 = arith.subf %2, %1 : vector<8x512xf32>
    %4 = math.absf %3 : vector<8x512xf32>
    %5 = vector.shape_cast %4 : vector<8x512xf32> to vector<1x8x512xf32>
    %cst = arith.constant dense<0.000000e+00> : vector<8x512xf32>
    %6 = vector.multi_reduction <add>, %5, %cst [0] : vector<1x8x512xf32> to vector<8x512xf32>
    %7 = vector.extract_strided_slice %6 {offsets = [0, 0], sizes = [8, 128], strides = [1, 1]} : vector<8x512xf32> to vector<8x128xf32>
    %8 = vector.extract_strided_slice %6 {offsets = [0, 128], sizes = [8, 128], strides = [1, 1]} : vector<8x512xf32> to vector<8x128xf32>
    %9 = arith.addf %7, %8 : vector<8x128xf32>
    %10 = vector.extract_strided_slice %6 {offsets = [0, 256], sizes = [8, 128], strides = [1, 1]} : vector<8x512xf32> to vector<8x128xf32>
    %11 = arith.addf %9, %10 : vector<8x128xf32>
    %12 = vector.extract_strided_slice %6 {offsets = [0, 384], sizes = [8, 128], strides = [1, 1]} : vector<8x512xf32> to vector<8x128xf32>
    %13 = arith.addf %11, %12 : vector<8x128xf32>
    %c0_3 = arith.constant 0 : index
    %c0_4 = arith.constant 0 : index
    %c0_5 = arith.constant 0 : index
    %14 = vector.load %arg3[%c0_3, %c0_4, %c0_5] : memref<1x8x128xf32, #tpu.memory_space<vmem>>, vector<1x8x128xf32>
    %15 = vector.shape_cast %14 : vector<1x8x128xf32> to vector<8x128xf32>
    %16 = vector.shape_cast %13 : vector<8x128xf32> to vector<1x8x128xf32>
    tpu.vector_store %arg3[%c0_3, %c0_4, %c0_5], %16 {strides = array<i32>} : memref<1x8x128xf32, #tpu.memory_space<vmem>>, vector<1x8x128xf32>,
    return
  }
  func.func @transform_0(%arg0: i32) -> (i32, i32) {
    %c0_i32 = arith.constant 0 : i32
    %c0_i32_0 = arith.constant 0 : i32
    return %arg0, %c0_i32 : i32, i32
  }
  func.func @transform_1(%arg0: i32) -> (i32, i32) {
    %c0_i32 = arith.constant 0 : i32
    %c0_i32_0 = arith.constant 0 : i32
    return %arg0, %c0_i32 : i32, i32
  }
  func.func @transform_2(%arg0: i32) -> (i32, i32, i32) {
    %c0_i32 = arith.constant 0 : i32
    %c0_i32_0 = arith.constant 0 : i32
    %c0_i32_1 = arith.constant 0 : i32
    return %arg0, %c0_i32, %c0_i32_0 : i32, i32, i32
  }
}

</mosaic_0001>

<llo_original>
// kernel: tpu_custom_call.1
$region0: #{tpu_custom_call.1}
  #allocation0 [shape = 'u32[]', space=smem, size = 0x4, offset = 0x4, fixed_abs, tag = 'smem constant byte address 0x4 - core index']
  #allocation1 [shape = 'u32[144,128]{1,0:T(1,128)}', space=vmem, size = 0x12000, scoped, tag = 'internal scratch']
  %s0 = inlined_call_operand.hbm [shape: f32[8,512], index: 0, kind: input, shape index: {}]
  %s1 = inlined_call_operand.hbm [shape: f32[8,512], index: 1, kind: input, shape index: {}]
  %s2 = inlined_call_operand.hbm [shape: f32[1,8,128], index: 2, kind: output, shape index: {}]
  %s3 = sld [smem:[#allocation0]]
  $region26: #{tpu_custom_call.1} parent=0
    _
  %s5 = ssub.s32 1, %s3
  %s6 = scalar_select 0, %s5, %s3
  $region1: #{tpu_custom_call.1} parent=0
    #allocation2 [shape = 'u8[16384]{0}', space=vmem, size = 0x4000, scoped, tag = 'input window, operand 0, single buffered']
    #allocation3 [shape = 's32[1]{0}', space=sflag, size = 0x4, scoped, tag = 'scoped memory for tpu_custom_call.1']
    #allocation4 [shape = 's32[1]{0}', space=sflag, size = 0x4, scoped, tag = 'scoped memory for tpu_custom_call.1']
    #allocation5 [shape = 'u8[16384]{0}', space=vmem, size = 0x4000, scoped, tag = 'input window, operand 1, single buffered']
    #allocation6 [shape = 's32[1]{0}', space=sflag, size = 0x4, scoped, tag = 'scoped memory for tpu_custom_call.1']
    #allocation7 [shape = 'u8[4096]{0}', space=vmem, size = 0x1000, scoped, tag = 'output window, operand 0, single buffered']
    %7 = vsyncpa [#allocation3], 0
    %8 = vsyncpa [#allocation6], 0
    %9 = vsyncpa [#allocation4], 0
    // Predicated region
    $region2: #{tpu_custom_call.1} parent=1 // pred_check
      _
    $region3: #{tpu_custom_call.1} parent=1 // pred_check_branch
      %11 = sbr.rel (0) target = $region5
    $region4: #{tpu_custom_call.1} parent=1 // pred_region
      %s13 = ssub.s32 512, 512
      %14 = vsyncadd [#allocation3], %s13
      %s16 = sshll.u32 [#allocation2], 4
      %s17 = int_to_ptr.vmem [resolvable:$true] %s16
      %19 = dma.hbm_to_vmem [thread:$0]  %s0, 512, %s17, [#allocation3]
    $region5: #{tpu_custom_call.1} parent=1 // pred_fallthru
      _
    // Predicated region
    $region6: #{tpu_custom_call.1} parent=1 // pred_check
      _
    $region7: #{tpu_custom_call.1} parent=1 // pred_check_branch
      %21 = sbr.rel (0) target = $region9
    $region8: #{tpu_custom_call.1} parent=1 // pred_region
      %s23 = ssub.s32 512, 512
      %24 = vsyncadd [#allocation6], %s23
      %s26 = sshll.u32 [#allocation5], 4
      %s27 = int_to_ptr.vmem [resolvable:$true] %s26
      %29 = dma.hbm_to_vmem [thread:$0]  %s1, 512, %s27, [#allocation6]
    $region9: #{tpu_custom_call.1} parent=1 // pred_fallthru
      _
    // Predicated region
    $region10: #{tpu_custom_call.1} parent=1 // pred_check
      _
    $region11: #{tpu_custom_call.1} parent=1 // pred_check_branch
      %31 = sbr.rel (0) target = $region13
    $region12: #{tpu_custom_call.1} parent=1 // pred_region
      %32 = dma.done [#allocation3], 512
    $region13: #{tpu_custom_call.1} parent=1 // pred_fallthru
      _
    // Predicated region
    $region14: #{tpu_custom_call.1} parent=1 // pred_check
      _
    $region15: #{tpu_custom_call.1} parent=1 // pred_check_branch
      %34 = sbr.rel (0) target = $region17
    $region16: #{tpu_custom_call.1} parent=1 // pred_region
      %35 = dma.done [#allocation6], 512
    $region17: #{tpu_custom_call.1} parent=1 // pred_fallthru
      _
    %v36 = vld [vmem:[#allocation2] sm:$0xff]
    %v37 = vld [vmem:[#allocation2 + $0x8] sm:$0xff]
    %v38 = vld [vmem:[#allocation2 + $0x10] sm:$0xff]
    %v39 = vld [vmem:[#allocation2 + $0x18] sm:$0xff]
    %v40 = vld [vmem:[#allocation5] sm:$0xff]
    %v41 = vld [vmem:[#allocation5 + $0x8] sm:$0xff]
    %v42 = vld [vmem:[#allocation5 + $0x10] sm:$0xff]
    %v43 = vld [vmem:[#allocation5 + $0x18] sm:$0xff]
    %v44 = vtanh.pop %v36
    %v45 = vtanh.pop %v37
    %v46 = vtanh.pop %v38
    %v47 = vtanh.pop %v39
    %v48 = vsub.f32 %v44, %v40
    %v49 = vsub.f32 %v45, %v41
    %v50 = vsub.f32 %v46, %v42
    %v51 = vsub.f32 %v47, %v43
    %v52 = vand.u32 2147483647, %v48
    %v53 = vand.u32 2147483647, %v49
    %v54 = vand.u32 2147483647, %v50
    %v55 = vand.u32 2147483647, %v51
    %v56 = vadd.f32 %v52, 0.0
    %v57 = vadd.f32 %v53, 0.0
    %v58 = vadd.f32 %v54, 0.0
    %v59 = vadd.f32 %v55, 0.0
    %v60 = vadd.f32 %v56, %v57
    %v61 = vadd.f32 %v60, %v58
    %v62 = vadd.f32 %v61, %v59
    %63 = vst [vmem:[#allocation7] sm:$0xff] %v62
    // Predicated region
    $region18: #{tpu_custom_call.1} parent=1 // pred_check
      _
    $region19: #{tpu_custom_call.1} parent=1 // pred_check_branch
      %65 = sbr.rel (0) target = $region21
    $region20: #{tpu_custom_call.1} parent=1 // pred_region
      %s67 = ssub.s32 128, 128
      %68 = vsyncadd [#allocation4], %s67
      %s70 = sshll.u32 [#allocation7], 4
      %s71 = int_to_ptr.vmem [resolvable:$true] %s70
      %73 = dma.vmem_to_hbm [thread:$0]  %s71, 128, %s2, [#allocation4]
    $region21: #{tpu_custom_call.1} parent=1 // pred_fallthru
      _
    // Predicated region
    $region22: #{tpu_custom_call.1} parent=1 // pred_check
      _
    $region23: #{tpu_custom_call.1} parent=1 // pred_check_branch
      %75 = sbr.rel (0) target = $region25
    $region24: #{tpu_custom_call.1} parent=1 // pred_region
      %76 = dma.done [#allocation4], 128
    $region25: #{tpu_custom_call.1} parent=1 // pred_fallthru
      _
    %77 = vsyncpa [#allocation3], 1
    %78 = vsyncpa [#allocation6], 1
    %79 = vsyncpa [#allocation4], 1

</llo_original>
